<compile_context>
chip_gen: v6e
topology: v6e:2x2x1
jax: 0.10.0
libtpu: 0.0.40
codegen_flags: <defaults>
</compile_context>

<pallas_src>
import jax
import jax.numpy as jnp
import numpy as np
from jax.experimental import pallas as pl
from jax.experimental.pallas import tpu as pltpu


def time_attention_kernel(x1_ref, x2_ref, w1a_ref, w1b_ref, w2a_ref, w2b_ref,
                          bn_s_ref, bn_b_ref, y1_ref, y2_ref):
    x1 = x1_ref[...]                                   # (Bt, Ck, HWkp)
    x2 = x2_ref[...]                                   # (Bt, Ck, HWkp)

    # AdaptiveAvgPool2d(1): per-(batch, folded-channel) sums, accumulated in
    # f32 inside the reduce.  The 1/HW mean factor is pre-folded into w1a/w1b
    # in the wrapper and the lane zero-pad contributes exactly zero.
    p1 = jnp.sum(x1, axis=-1, dtype=jnp.float32)       # (Bt, Ck)
    p2 = jnp.sum(x2, axis=-1, dtype=jnp.float32)       # (Bt, Ck)

    # mlp: Conv1x1(2C->A, no bias) -> folded BN -> ReLU -> Conv1x1(A->2C),
    # batched over the Bt batch-tile in a single pair of tiny matmuls.
    h = (jnp.dot(p1, w1a_ref[...], preferred_element_type=jnp.float32) +
         jnp.dot(p2, w1b_ref[...], preferred_element_type=jnp.float32))   # (Bt, A)
    h = jnp.maximum(h * bn_s_ref[...] + bn_b_ref[...], 0.0)

    # Residual gate: x*sigmoid(y) + x == x*(sigmoid(y)+1); the +1 is applied to
    # the tiny (Bt, Ck) gate so the big slab sees exactly one multiply.
    g1 = jax.nn.sigmoid(jnp.dot(h, w2a_ref[...],
                                preferred_element_type=jnp.float32)) + 1.0  # (Bt, Ck)
    g2 = jax.nn.sigmoid(jnp.dot(h, w2b_ref[...],
                                preferred_element_type=jnp.float32)) + 1.0  # (Bt, Ck)

    y1_ref[...] = (x1 * g1[:, :, None].astype(x1.dtype)).astype(y1_ref.dtype)
    y2_ref[...] = (x2 * g2[:, :, None].astype(x2.dtype)).astype(y2_ref.dtype)


def _vmem_budget_bytes():
    """Usable scoped-VMEM budget on this chip: physical capacity minus ~8 MiB
    of headroom for Mosaic internals (v7x: ~56 MiB, v5e/v6e: ~120 MiB)."""
    try:
        cap = int(pltpu.get_tpu_info().vmem_capacity_bytes)
    except Exception:
        cap = 64 << 20          # conservative fallback: v7x per-TC VMEM
    return max(cap - (8 << 20), 16 << 20)


def _fold_factor(C, HW, dtype):
    """Smallest k so the per-batch slab reshapes to (C*k, HW//k) with full
    sublanes for this dtype (8 rows f32 / 16 bf16 / 32 int8-fp8) while keeping
    HW//k a multiple of 128 (so the fold itself never adds lane padding)."""
    sub = max(8, 32 // jnp.dtype(dtype).itemsize)
    if C % sub == 0:
        return 1
    for k in (2, 4, 8, 16, 32, 64, 128):
        if (C * k) % sub == 0 and HW % k == 0 and (HW // k) % 128 == 0:
            return k
    return 1


def _pick_batch_tile(B, per_batch_bytes, vmem_budget, target_bytes=2 << 20):
    """Largest divisor Bt of B such that the double-buffered working set fits
    in VMEM and the input block reaches ~target_bytes, while keeping at least
    two grid steps when B >= 2 so v7x's two TensorCores both get work."""
    if B <= 1:
        return 1
    divisors = sorted(d for d in range(1, B + 1) if B % d == 0)
    max_bt = max(d for d in divisors if d <= B // 2)       # >= 2 grid steps
    best = 1
    for d in divisors:
        if d > max_bt:
            break
        if 8 * d * per_batch_bytes + (4 << 20) > vmem_budget:
            break
        best = d
        if d * per_batch_bytes >= target_bytes:
            break
    return best


@jax.jit
def time_attention(x1, x2, w1, w2, bn_scale, bn_bias):
    """x1, x2: (B, C, H, W). w1: (A, 2C), w2: (2C, A), bn_*: (A,).
    Returns (y1, y2) with the same shapes/dtypes as the inputs."""
    B, C, H, W = x1.shape
    HW = H * W
    A = w1.shape[0]

    # Sublane fold (dtype-aware) + lane zero-pad to a multiple of 128 so the
    # big loads/stores are unmasked and vregs are dense.
    k = _fold_factor(C, HW, x1.dtype)
    Ck = C * k
    HWk = HW // k
    HWkp = ((HWk + 127) // 128) * 128

    x1f = x1.reshape(B, Ck, HWk)
    x2f = x2.reshape(B, Ck, HWk)
    if HWkp != HWk:
        pad = ((0, 0), (0, 0), (0, HWkp - HWk))
        x1f = jnp.pad(x1f, pad)
        x2f = jnp.pad(x2f, pad)

    # Split the first 1x1 conv by temporal branch, replicate columns to match
    # the folded rows and fold in the 1/HW mean scale; pre-transpose so the
    # kernel needs no concat, no rescale, no transpose.
    w1 = w1.astype(jnp.float32)
    w2 = w2.astype(jnp.float32)
    inv_hw = 1.0 / float(HW)
    w1a_t = (jnp.repeat(w1[:, :C], k, axis=1) * inv_hw).T     # (Ck, A)
    w1b_t = (jnp.repeat(w1[:, C:], k, axis=1) * inv_hw).T     # (Ck, A)
    w2a_t = jnp.repeat(w2[:C], k, axis=0).T                   # (A, Ck)
    w2b_t = jnp.repeat(w2[C:], k, axis=0).T                   # (A, Ck)
    bn_s = bn_scale.reshape(1, A).astype(jnp.float32)
    bn_b = bn_bias.reshape(1, A).astype(jnp.float32)

    # VMEM budgeting / grid granularity.
    itemsize = jnp.dtype(x1.dtype).itemsize
    per_batch_bytes = Ck * HWkp * itemsize
    budget = _vmem_budget_bytes()
    Bt = _pick_batch_tile(B, per_batch_bytes, budget)
    block_bytes = Bt * per_batch_bytes
    double_buffer = 8 * block_bytes + (4 << 20) <= budget
    buffering = 2 if double_buffer else 1
    # TODO(synk): if even the single-buffered working set (4*block_bytes at
    # Bt=1) exceeds the budget (huge H*W on v7x's 64 MiB VMEM), add a two-phase
    # HW-tiled fallback (pool pass accumulating (B,2C) sums over an "arbitrary"
    # HW-tile axis, then a streaming gate pass); 3x HBM traffic => last resort.

    weight_bytes = 4 * Ck * A * 4 + 2 * A * 4
    vmem_limit = int(min(budget,
                         max(4 * buffering * block_bytes + 2 * weight_bytes
                             + (2 << 20), 32 << 20)))

    def _big_spec():
        if double_buffer:
            return pl.BlockSpec((Bt, Ck, HWkp), lambda b: (b, 0, 0))
        # VMEM-tight mode: no prefetch buffer on the four large slabs, letting
        # ~2x larger slabs stay fully fused; the DMA is >>20x the compute so
        # the lost overlap is cheap compared with splitting the kernel.
        return pl.BlockSpec((Bt, Ck, HWkp), lambda b: (b, 0, 0),
                            pipeline_mode=pl.Buffered(1))

    y1, y2 = pl.pallas_call(
        time_attention_kernel,
        out_shape=(jax.ShapeDtypeStruct((B, Ck, HWkp), x1.dtype),
                   jax.ShapeDtypeStruct((B, Ck, HWkp), x2.dtype)),
        grid_spec=pltpu.PrefetchScalarGridSpec(
            num_scalar_prefetch=0,
            grid=(B // Bt,),
            in_specs=[
                _big_spec(),
                _big_spec(),
                pl.BlockSpec((Ck, A), lambda b: (0, 0)),
                pl.BlockSpec((Ck, A), lambda b: (0, 0)),
                pl.BlockSpec((A, Ck), lambda b: (0, 0)),
                pl.BlockSpec((A, Ck), lambda b: (0, 0)),
                pl.BlockSpec((1, A), lambda b: (0, 0)),
                pl.BlockSpec((1, A), lambda b: (0, 0)),
            ],
            out_specs=[_big_spec(), _big_spec()],
        ),
        # y1/y2 are same-shape gated copies of x1/x2: alias to drop two
        # full-size HBM output allocations (donate x1/x2 at the jit boundary
        # to make the alias copy-free).
        input_output_aliases={0: 0, 1: 1},
        compiler_params=pltpu.CompilerParams(
            dimension_semantics=("parallel",),
            vmem_limit_bytes=vmem_limit),
    )(x1f, x2f, w1a_t, w1b_t, w2a_t, w2b_t, bn_s, bn_b)

    if HWkp != HWk:
        y1 = y1[:, :, :HWk]
        y2 = y2[:, :, :HWk]
    return y1.reshape(B, C, H, W), y2.reshape(B, C, H, W)


def time_attention_ref(x1, x2, w1, w2, bn_scale, bn_bias):
    """Pure-JAX reference mirroring the PyTorch forward (BN in eval mode)."""
    B, C, H, W = x1.shape
    x = jnp.concatenate([x1, x2], axis=1)                    # (B, 2C, H, W)
    pooled = jnp.mean(x, axis=(2, 3))                        # (B, 2C)
    h = pooled @ w1.T                                        # (B, A)
    h = jnp.maximum(h * bn_scale[None, :] + bn_bias[None, :], 0.0)
    y = h @ w2.T                                             # (B, 2C)
    a = jax.nn.sigmoid(y)
    a1 = a[:, :C].reshape(B, C, 1, 1)
    a2 = a[:, C:].reshape(B, C, 1, 1)
    return x1 * a1 + x1, x2 * a2 + x2


if __name__ == "__main__":
    B, C, H, W = 2, 4, 16, 16
    attn_channels = max(C // 16, 8)          # = 8, as in the module

    key = jax.random.PRNGKey(0)
    k_x1, k_x2, k_w1, k_w2, k_g, k_b = jax.random.split(key, 6)

    x1 = jax.random.normal(k_x1, (B, C, H, W), dtype=jnp.float32)
    x2 = jax.random.normal(k_x2, (B, C, H, W), dtype=jnp.float32)

    # Conv2d(2C, A, 1, bias=False) weight -> (A, 2C); Conv2d(A, 2C, 1) -> (2C, A)
    w1 = 0.1 * jax.random.normal(k_w1, (attn_channels, 2 * C), dtype=jnp.float32)
    w2 = 0.1 * jax.random.normal(k_w2, (2 * C, attn_channels), dtype=jnp.float32)

    # BatchNorm2d(A) in inference mode, folded to scale/shift.
    gamma = 1.0 + 0.1 * jax.random.normal(k_g, (attn_channels,), dtype=jnp.float32)
    beta = 0.1 * jax.random.normal(k_b, (attn_channels,), dtype=jnp.float32)
    running_mean = jnp.zeros((attn_channels,), dtype=jnp.float32)
    running_var = jnp.ones((attn_channels,), dtype=jnp.float32)
    eps = 1e-5
    bn_scale = gamma / jnp.sqrt(running_var + eps)
    bn_bias = beta - running_mean * bn_scale

    # Reference first (keeps x1/x2 valid regardless of output aliasing).
    r1, r2 = time_attention_ref(x1, x2, w1, w2, bn_scale, bn_bias)

    y1, y2 = time_attention(x1, x2, w1, w2, bn_scale, bn_bias)
    jax.block_until_ready((y1, y2))

    np.testing.assert_allclose(np.asarray(y1), np.asarray(r1), rtol=1e-5, atol=1e-5)
    np.testing.assert_allclose(np.asarray(y2), np.asarray(r2), rtol=1e-5, atol=1e-5)

    print("KERNEL_OK")
</pallas_src>

<mosaic_0001>
module attributes {stable_mosaic.version = 11 : i64} {
  func.func @time_attention_kernel(%arg0: i32, %arg1: memref<1x8x128xf32, #tpu.memory_space<vmem>>, %arg2: memref<1x8x128xf32, #tpu.memory_space<vmem>>, %arg3: memref<8x8xf32, #tpu.memory_space<vmem>>, %arg4: memref<8x8xf32, #tpu.memory_space<vmem>>, %arg5: memref<8x8xf32, #tpu.memory_space<vmem>>, %arg6: memref<8x8xf32, #tpu.memory_space<vmem>>, %arg7: memref<1x8xf32, #tpu.memory_space<vmem>>, %arg8: memref<1x8xf32, #tpu.memory_space<vmem>>, %arg9: memref<1x8x128xf32, #tpu.memory_space<vmem>>, %arg10: memref<1x8x128xf32, #tpu.memory_space<vmem>>) attributes {dimension_semantics = [#tpu.dimension_semantics<parallel>], iteration_bounds = array<i64: 2>, scalar_prefetch = 0 : i64, scratch_operands = 0 : i64, tpu.core_type = #tpu.core_type<tc>, window_params = [{transform_indices = @transform_0, window_bounds = array<i64: 1, 8, 128>}, {transform_indices = @transform_1, window_bounds = array<i64: 1, 8, 128>}, {pipeline_mode = #tpu.pipeline_mode<synchronous>, transform_indices = @transform_2, window_bounds = array<i64: 8, 8>}, {pipeline_mode = #tpu.pipeline_mode<synchronous>, transform_indices = @transform_3, window_bounds = array<i64: 8, 8>}, {pipeline_mode = #tpu.pipeline_mode<synchronous>, transform_indices = @transform_4, window_bounds = array<i64: 8, 8>}, {pipeline_mode = #tpu.pipeline_mode<synchronous>, transform_indices = @transform_5, window_bounds = array<i64: 8, 8>}, {pipeline_mode = #tpu.pipeline_mode<synchronous>, transform_indices = @transform_6, window_bounds = array<i64: 1, 8>}, {pipeline_mode = #tpu.pipeline_mode<synchronous>, transform_indices = @transform_7, window_bounds = array<i64: 1, 8>}, {transform_indices = @transform_8, window_bounds = array<i64: 1, 8, 128>}, {transform_indices = @transform_9, window_bounds = array<i64: 1, 8, 128>}]} {
    %c0 = arith.constant 0 : index
    %c0_0 = arith.constant 0 : index
    %c0_1 = arith.constant 0 : index
    %0 = vector.load %arg1[%c0, %c0_0, %c0_1] : memref<1x8x128xf32, #tpu.memory_space<vmem>>, vector<1x8x128xf32>
    %c0_2 = arith.constant 0 : index
    %c0_3 = arith.constant 0 : index
    %c0_4 = arith.constant 0 : index
    %1 = vector.load %arg2[%c0_2, %c0_3, %c0_4] : memref<1x8x128xf32, #tpu.memory_space<vmem>>, vector<1x8x128xf32>
    %cst = arith.constant dense<0.000000e+00> : vector<1x8xf32>
    %2 = vector.multi_reduction <add>, %0, %cst [2] : vector<1x8x128xf32> to vector<1x8xf32>
    %cst_5 = arith.constant dense<0.000000e+00> : vector<1x8xf32>
    %3 = vector.multi_reduction <add>, %1, %cst_5 [2] : vector<1x8x128xf32> to vector<1x8xf32>
    %c0_6 = arith.constant 0 : index
    %c0_7 = arith.constant 0 : index
    %4 = vector.load %arg3[%c0_6, %c0_7] : memref<8x8xf32, #tpu.memory_space<vmem>>, vector<8x8xf32>
    %cst_8 = arith.constant dense<0.000000e+00> : vector<1x8xf32>
    %5 = tpu.matmul %2, %4, %cst_8 {dimension_numbers = #tpu.dot_dimension_numbers<[1], [0], [0], [1], [0, 0, 1, 1], [], []>} : vector<1x8xf32>, vector<8x8xf32>, vector<1x8xf32> -> vector<1x8xf32>
    %c0_9 = arith.constant 0 : index
    %c0_10 = arith.constant 0 : index
    %6 = vector.load %arg4[%c0_9, %c0_10] : memref<8x8xf32, #tpu.memory_space<vmem>>, vector<8x8xf32>
    %cst_11 = arith.constant dense<0.000000e+00> : vector<1x8xf32>
    %7 = tpu.matmul %3, %6, %cst_11 {dimension_numbers = #tpu.dot_dimension_numbers<[1], [0], [0], [1], [0, 0, 1, 1], [], []>} : vector<1x8xf32>, vector<8x8xf32>, vector<1x8xf32> -> vector<1x8xf32>
    %8 = arith.addf %5, %7 : vector<1x8xf32>
    %c0_12 = arith.constant 0 : index
    %c0_13 = arith.constant 0 : index
    %9 = vector.load %arg7[%c0_12, %c0_13] : memref<1x8xf32, #tpu.memory_space<vmem>>, vector<1x8xf32>
    %10 = arith.mulf %8, %9 : vector<1x8xf32>
    %c0_14 = arith.constant 0 : index
    %c0_15 = arith.constant 0 : index
    %11 = vector.load %arg8[%c0_14, %c0_15] : memref<1x8xf32, #tpu.memory_space<vmem>>, vector<1x8xf32>
    %12 = arith.addf %10, %11 : vector<1x8xf32>
    %cst_16 = arith.constant 0.000000e+00 : f32
    %13 = vector.broadcast %cst_16 : f32 to vector<1x8xf32>
    %14 = arith.maximumf %12, %13 : vector<1x8xf32>
    %c0_17 = arith.constant 0 : index
    %c0_18 = arith.constant 0 : index
    %15 = vector.load %arg5[%c0_17, %c0_18] : memref<8x8xf32, #tpu.memory_space<vmem>>, vector<8x8xf32>
    %cst_19 = arith.constant dense<0.000000e+00> : vector<1x8xf32>
    %16 = tpu.matmul %14, %15, %cst_19 {dimension_numbers = #tpu.dot_dimension_numbers<[1], [0], [0], [1], [0, 0, 1, 1], [], []>} : vector<1x8xf32>, vector<8x8xf32>, vector<1x8xf32> -> vector<1x8xf32>
    %17 = arith.negf %16 : vector<1x8xf32>
    %18 = math.exp %17 : vector<1x8xf32>
    %cst_20 = arith.constant 1.000000e+00 : f32
    %19 = vector.broadcast %cst_20 : f32 to vector<1x8xf32>
    %20 = arith.addf %19, %18 : vector<1x8xf32>
    %21 = arith.divf %19, %20 : vector<1x8xf32>
    %cst_21 = arith.constant 1.000000e+00 : f32
    %22 = vector.broadcast %cst_21 : f32 to vector<1x8xf32>
    %23 = arith.addf %21, %22 : vector<1x8xf32>
    %c0_22 = arith.constant 0 : index
    %c0_23 = arith.constant 0 : index
    %24 = vector.load %arg6[%c0_22, %c0_23] : memref<8x8xf32, #tpu.memory_space<vmem>>, vector<8x8xf32>
    %cst_24 = arith.constant dense<0.000000e+00> : vector<1x8xf32>
    %25 = tpu.matmul %14, %24, %cst_24 {dimension_numbers = #tpu.dot_dimension_numbers<[1], [0], [0], [1], [0, 0, 1, 1], [], []>} : vector<1x8xf32>, vector<8x8xf32>, vector<1x8xf32> -> vector<1x8xf32>
    %26 = arith.negf %25 : vector<1x8xf32>
    %27 = math.exp %26 : vector<1x8xf32>
    %cst_25 = arith.constant 1.000000e+00 : f32
    %28 = vector.broadcast %cst_25 : f32 to vector<1x8xf32>
    %29 = arith.addf %28, %27 : vector<1x8xf32>
    %30 = arith.divf %28, %29 : vector<1x8xf32>
    %cst_26 = arith.constant 1.000000e+00 : f32
    %31 = vector.broadcast %cst_26 : f32 to vector<1x8xf32>
    %32 = arith.addf %30, %31 : vector<1x8xf32>
    %33 = vector.shape_cast %23 : vector<1x8xf32> to vector<1x8x1xf32>
    %34 = vector.broadcast %33 : vector<1x8x1xf32> to vector<1x8x128xf32>
    %35 = arith.mulf %0, %34 : vector<1x8x128xf32>
    %c0_27 = arith.constant 0 : index
    %c0_28 = arith.constant 0 : index
    %c0_29 = arith.constant 0 : index
    %36 = vector.load %arg9[%c0_27, %c0_28, %c0_29] : memref<1x8x128xf32, #tpu.memory_space<vmem>>, vector<1x8x128xf32>
    tpu.vector_store %arg9[%c0_27, %c0_28, %c0_29], %35 {strides = array<i32>} : memref<1x8x128xf32, #tpu.memory_space<vmem>>, vector<1x8x128xf32>,
    %37 = vector.shape_cast %32 : vector<1x8xf32> to vector<1x8x1xf32>
    %38 = vector.broadcast %37 : vector<1x8x1xf32> to vector<1x8x128xf32>
    %39 = arith.mulf %1, %38 : vector<1x8x128xf32>
    %c0_30 = arith.constant 0 : index
    %c0_31 = arith.constant 0 : index
    %c0_32 = arith.constant 0 : index
    %40 = vector.load %arg10[%c0_30, %c0_31, %c0_32] : memref<1x8x128xf32, #tpu.memory_space<vmem>>, vector<1x8x128xf32>
    tpu.vector_store %arg10[%c0_30, %c0_31, %c0_32], %39 {strides = array<i32>} : memref<1x8x128xf32, #tpu.memory_space<vmem>>, vector<1x8x128xf32>,
    return
  }
  func.func @transform_0(%arg0: i32) -> (i32, i32, i32) {
    %c0_i32 = arith.constant 0 : i32
    %c0_i32_0 = arith.constant 0 : i32
    %c0_i32_1 = arith.constant 0 : i32
    return %arg0, %c0_i32, %c0_i32_0 : i32, i32, i32
  }
  func.func @transform_1(%arg0: i32) -> (i32, i32, i32) {
    %c0_i32 = arith.constant 0 : i32
    %c0_i32_0 = arith.constant 0 : i32
    %c0_i32_1 = arith.constant 0 : i32
    return %arg0, %c0_i32, %c0_i32_0 : i32, i32, i32
  }
  func.func @transform_2(%arg0: i32) -> (i32, i32) {
    %c0_i32 = arith.constant 0 : i32
    %c0_i32_0 = arith.constant 0 : i32
    %c0_i32_1 = arith.constant 0 : i32
    return %c0_i32, %c0_i32_0 : i32, i32
  }
  func.func @transform_3(%arg0: i32) -> (i32, i32) {
    %c0_i32 = arith.constant 0 : i32
    %c0_i32_0 = arith.constant 0 : i32
    %c0_i32_1 = arith.constant 0 : i32
    return %c0_i32, %c0_i32_0 : i32, i32
  }
  func.func @transform_4(%arg0: i32) -> (i32, i32) {
    %c0_i32 = arith.constant 0 : i32
    %c0_i32_0 = arith.constant 0 : i32
    %c0_i32_1 = arith.constant 0 : i32
    return %c0_i32, %c0_i32_0 : i32, i32
  }
  func.func @transform_5(%arg0: i32) -> (i32, i32) {
    %c0_i32 = arith.constant 0 : i32
    %c0_i32_0 = arith.constant 0 : i32
    %c0_i32_1 = arith.constant 0 : i32
    return %c0_i32, %c0_i32_0 : i32, i32
  }
  func.func @transform_6(%arg0: i32) -> (i32, i32) {
    %c0_i32 = arith.constant 0 : i32
    %c0_i32_0 = arith.constant 0 : i32
    %c0_i32_1 = arith.constant 0 : i32
    return %c0_i32, %c0_i32_0 : i32, i32
  }
  func.func @transform_7(%arg0: i32) -> (i32, i32) {
    %c0_i32 = arith.constant 0 : i32
    %c0_i32_0 = arith.constant 0 : i32
    %c0_i32_1 = arith.constant 0 : i32
    return %c0_i32, %c0_i32_0 : i32, i32
  }
  func.func @transform_8(%arg0: i32) -> (i32, i32, i32) {
    %c0_i32 = arith.constant 0 : i32
    %c0_i32_0 = arith.constant 0 : i32
    %c0_i32_1 = arith.constant 0 : i32
    return %arg0, %c0_i32, %c0_i32_0 : i32, i32, i32
  }
  func.func @transform_9(%arg0: i32) -> (i32, i32, i32) {
    %c0_i32 = arith.constant 0 : i32
    %c0_i32_0 = arith.constant 0 : i32
    %c0_i32_1 = arith.constant 0 : i32
    return %arg0, %c0_i32, %c0_i32_0 : i32, i32, i32
  }
}

</mosaic_0001>

<llo_original>
// kernel: time_attention.1
$region0: #{time_attention.1}
  #allocation0 [shape = 'u32[]', space=smem, size = 0x4, offset = 0x4, fixed_abs, tag = 'smem constant byte address 0x4 - core index']
  #allocation1 [shape = 'u32[144,128]{1,0:T(1,128)}', space=vmem, size = 0x12000, scoped, tag = 'internal scratch']
  %s0 = inlined_call_operand.vmem [shape: f32[2,8,128], index: 0, kind: input, shape index: {}, may-alias: {0,8}]
  %s1 = inlined_call_operand.vmem [shape: f32[2,8,128], index: 1, kind: input, shape index: {}, may-alias: {1,9}]
  %s2 = inlined_call_operand.vmem [shape: f32[8,8], index: 2, kind: input, shape index: {}]
  %s3 = inlined_call_operand.vmem [shape: f32[8,8], index: 3, kind: input, shape index: {}]
  %s4 = inlined_call_operand.vmem [shape: f32[8,8], index: 4, kind: input, shape index: {}]
  %s5 = inlined_call_operand.vmem [shape: f32[8,8], index: 5, kind: input, shape index: {}]
  %s6 = inlined_call_operand.vmem [shape: f32[1,8], index: 6, kind: input, shape index: {}]
  %s7 = inlined_call_operand.vmem [shape: f32[1,8], index: 7, kind: input, shape index: {}]
  %s8 = inlined_call_operand.vmem [shape: f32[2,8,128], index: 8, kind: output, shape index: {0}, may-alias: {0,8}]
  %s9 = inlined_call_operand.vmem [shape: f32[2,8,128], index: 9, kind: output, shape index: {1}, may-alias: {1,9}]
  %10 = xla_tuple %s8, %s9
  %s11 = sld [smem:[#allocation0]]
  $region73: #{time_attention.1} parent=0
    _
  %s13 = ssub.s32 1, %s11
  %s14 = scalar_select 0, %s13, %s11
  loop: start=0, step=1, limit=4
  $region2: #{time_attention.1} parent=0 // loop_pre_header
    _
  $region3: #{time_attention.1} parent=0 // loop_header
    %s16 = sphi 0, %s20
    %p17 = scmp.ge.s32.totalorder %s16, 4
    %s26 = sphi 0, %s28
    %s29 = sphi 0, %s26
    %s30 = sphi 0, %s29
    %s46 = sphi 0, %s30
    %s52 = sphi 0, %s54
    %s55 = sphi 0, %s52
    %s56 = sphi 0, %s55
    %s72 = sphi 0, %s56
    %s76 = sphi 0, %s76
    %s78 = sphi 0, %s76
    %s79 = sphi 0, %s78
    %s93 = sphi 0, %s79
    %s97 = sphi 0, %s97
    %s99 = sphi 0, %s97
    %s100 = sphi 0, %s99
    %s114 = sphi 0, %s100
    %s118 = sphi 0, %s118
    %s120 = sphi 0, %s118
    %s121 = sphi 0, %s120
    %s135 = sphi 0, %s121
    %s139 = sphi 0, %s139
    %s141 = sphi 0, %s139
    %s142 = sphi 0, %s141
    %s156 = sphi 0, %s142
    %s160 = sphi 0, %s160
    %s162 = sphi 0, %s160
    %s163 = sphi 0, %s162
    %s177 = sphi 0, %s163
    %s181 = sphi 0, %s181
    %s183 = sphi 0, %s181
    %s184 = sphi 0, %s183
    %s198 = sphi 0, %s184
    %s204 = sphi 0, %s206
    %s207 = sphi 0, %s204
    %s208 = sphi 0, %s207
    %s224 = sphi 0, %s208
    %s230 = sphi 0, %s232
    %s233 = sphi 0, %s230
    %s234 = sphi 0, %s233
    %s250 = sphi 0, %s234
  $region4: #{time_attention.1} parent=0 // loop_header_branch
    %19 = sbr.rel (%p17) target = $region8
  $region5: #{time_attention.1} parent=0 // loop_body
    %s21 = ssub.s32 %s16, 1
    %s22 = ssub.s32 %s16, 2
    %s23 = sadd.s32 %s16, 1
    %s24 = ssub.s32 %s16, %s23
    %p25 = scmp.eq.s32.totalorder %s24, 0
    %s27 = sadd.s32 %s26, 1
    %s28 = scalar_select %p25, %s26, %s27
    %p31 = pneg %p25
    %p32 = scmp.eq.s32.totalorder %s16, 1
    %p33 = por %p31, %p32
    %p34 = scmp.ne.s32.totalorder %s26, %s29
    %p35 = scmp.eq.s32.totalorder %s16, 0
    %p36 = por %p34, %p35
    %p37 = scmp.ne.s32.totalorder %s26, %s29
    %p38 = scmp.eq.s32.totalorder %s21, 1
    %p39 = por %p37, %p38
    %p40 = scmp.ne.s32.totalorder %s29, %s30
    %p41 = scmp.eq.s32.totalorder %s21, 0
    %p42 = por %p40, %p41
    %p43 = scmp.ne.s32.totalorder %s29, %s30
    %p44 = scmp.eq.s32.totalorder %s22, 1
    %p45 = por %p43, %p44
    %p47 = scmp.ne.s32.totalorder %s30, %s46
    %p48 = scmp.eq.s32.totalorder %s22, 0
    %p49 = por %p47, %p48
    %s50 = ssub.s32 %s16, %s23
    %p51 = scmp.eq.s32.totalorder %s50, 0
    %s53 = sadd.s32 %s52, 1
    %s54 = scalar_select %p51, %s52, %s53
    %p57 = pneg %p51
    %p58 = scmp.eq.s32.totalorder %s16, 1
    %p59 = por %p57, %p58
    %p60 = scmp.ne.s32.totalorder %s52, %s55
    %p61 = scmp.eq.s32.totalorder %s16, 0
    %p62 = por %p60, %p61
    %p63 = scmp.ne.s32.totalorder %s52, %s55
    %p64 = scmp.eq.s32.totalorder %s21, 1
    %p65 = por %p63, %p64
    %p66 = scmp.ne.s32.totalorder %s55, %s56
    %p67 = scmp.eq.s32.totalorder %s21, 0
    %p68 = por %p66, %p67
    %p69 = scmp.ne.s32.totalorder %s55, %s56
    %p70 = scmp.eq.s32.totalorder %s22, 1
    %p71 = por %p69, %p70
    %p73 = scmp.ne.s32.totalorder %s56, %s72
    %p74 = scmp.eq.s32.totalorder %s22, 0
    %p75 = por %p73, %p74
    %s77 = sadd.s32 %s76, 1
    %p80 = scmp.eq.s32.totalorder %s16, 1
    %p81 = scmp.ne.s32.totalorder %s76, %s78
    %p82 = scmp.eq.s32.totalorder %s16, 0
    %p83 = por %p81, %p82
    %p84 = scmp.ne.s32.totalorder %s76, %s78
    %p85 = scmp.eq.s32.totalorder %s21, 1
    %p86 = por %p84, %p85
    %p87 = scmp.ne.s32.totalorder %s78, %s79
    %p88 = scmp.eq.s32.totalorder %s21, 0
    %p89 = por %p87, %p88
    %p90 = scmp.ne.s32.totalorder %s78, %s79
    %p91 = scmp.eq.s32.totalorder %s22, 1
    %p92 = por %p90, %p91
    %p94 = scmp.ne.s32.totalorder %s79, %s93
    %p95 = scmp.eq.s32.totalorder %s22, 0
    %p96 = por %p94, %p95
    %s98 = sadd.s32 %s97, 1
    %p101 = scmp.eq.s32.totalorder %s16, 1
    %p102 = scmp.ne.s32.totalorder %s97, %s99
    %p103 = scmp.eq.s32.totalorder %s16, 0
    %p104 = por %p102, %p103
    %p105 = scmp.ne.s32.totalorder %s97, %s99
    %p106 = scmp.eq.s32.totalorder %s21, 1
    %p107 = por %p105, %p106
    %p108 = scmp.ne.s32.totalorder %s99, %s100
    %p109 = scmp.eq.s32.totalorder %s21, 0
    %p110 = por %p108, %p109
    %p111 = scmp.ne.s32.totalorder %s99, %s100
    %p112 = scmp.eq.s32.totalorder %s22, 1
    %p113 = por %p111, %p112
    %p115 = scmp.ne.s32.totalorder %s100, %s114
    %p116 = scmp.eq.s32.totalorder %s22, 0
    %p117 = por %p115, %p116
    %s119 = sadd.s32 %s118, 1
    %p122 = scmp.eq.s32.totalorder %s16, 1
    %p123 = scmp.ne.s32.totalorder %s118, %s120
    %p124 = scmp.eq.s32.totalorder %s16, 0
    %p125 = por %p123, %p124
    %p126 = scmp.ne.s32.totalorder %s118, %s120
    %p127 = scmp.eq.s32.totalorder %s21, 1
    %p128 = por %p126, %p127
    %p129 = scmp.ne.s32.totalorder %s120, %s121
    %p130 = scmp.eq.s32.totalorder %s21, 0
    %p131 = por %p129, %p130
    %p132 = scmp.ne.s32.totalorder %s120, %s121
    %p133 = scmp.eq.s32.totalorder %s22, 1
    %p134 = por %p132, %p133
    %p136 = scmp.ne.s32.totalorder %s121, %s135
    %p137 = scmp.eq.s32.totalorder %s22, 0
    %p138 = por %p136, %p137
    %s140 = sadd.s32 %s139, 1
    %p143 = scmp.eq.s32.totalorder %s16, 1
    %p144 = scmp.ne.s32.totalorder %s139, %s141
    %p145 = scmp.eq.s32.totalorder %s16, 0
    %p146 = por %p144, %p145
    %p147 = scmp.ne.s32.totalorder %s139, %s141
    %p148 = scmp.eq.s32.totalorder %s21, 1
    %p149 = por %p147, %p148
    %p150 = scmp.ne.s32.totalorder %s141, %s142
    %p151 = scmp.eq.s32.totalorder %s21, 0
    %p152 = por %p150, %p151
    %p153 = scmp.ne.s32.totalorder %s141, %s142
    %p154 = scmp.eq.s32.totalorder %s22, 1
    %p155 = por %p153, %p154
    %p157 = scmp.ne.s32.totalorder %s142, %s156
    %p158 = scmp.eq.s32.totalorder %s22, 0
    %p159 = por %p157, %p158
    %s161 = sadd.s32 %s160, 1
    %p164 = scmp.eq.s32.totalorder %s16, 1
    %p165 = scmp.ne.s32.totalorder %s160, %s162
    %p166 = scmp.eq.s32.totalorder %s16, 0
    %p167 = por %p165, %p166
    %p168 = scmp.ne.s32.totalorder %s160, %s162
    %p169 = scmp.eq.s32.totalorder %s21, 1
    %p170 = por %p168, %p169
    %p171 = scmp.ne.s32.totalorder %s162, %s163
    %p172 = scmp.eq.s32.totalorder %s21, 0
    %p173 = por %p171, %p172
    %p174 = scmp.ne.s32.totalorder %s162, %s163
    %p175 = scmp.eq.s32.totalorder %s22, 1
    %p176 = por %p174, %p175
    %p178 = scmp.ne.s32.totalorder %s163, %s177
    %p179 = scmp.eq.s32.totalorder %s22, 0
    %p180 = por %p178, %p179
    %s182 = sadd.s32 %s181, 1
    %p185 = scmp.eq.s32.totalorder %s16, 1
    %p186 = scmp.ne.s32.totalorder %s181, %s183
    %p187 = scmp.eq.s32.totalorder %s16, 0
    %p188 = por %p186, %p187
    %p189 = scmp.ne.s32.totalorder %s181, %s183
    %p190 = scmp.eq.s32.totalorder %s21, 1
    %p191 = por %p189, %p190
    %p192 = scmp.ne.s32.totalorder %s183, %s184
    %p193 = scmp.eq.s32.totalorder %s21, 0
    %p194 = por %p192, %p193
    %p195 = scmp.ne.s32.totalorder %s183, %s184
    %p196 = scmp.eq.s32.totalorder %s22, 1
    %p197 = por %p195, %p196
    %p199 = scmp.ne.s32.totalorder %s184, %s198
    %p200 = scmp.eq.s32.totalorder %s22, 0
    %p201 = por %p199, %p200
    %s202 = ssub.s32 %s16, %s23
    %p203 = scmp.eq.s32.totalorder %s202, 0
    %s205 = sadd.s32 %s204, 1
    %s206 = scalar_select %p203, %s204, %s205
    %p209 = pneg %p203
    %p210 = scmp.eq.s32.totalorder %s16, 1
    %p211 = por %p209, %p210
    %p212 = scmp.ne.s32.totalorder %s204, %s207
    %p213 = scmp.eq.s32.totalorder %s16, 0
    %p214 = por %p212, %p213
    %p215 = scmp.ne.s32.totalorder %s204, %s207
    %p216 = scmp.eq.s32.totalorder %s21, 1
    %p217 = por %p215, %p216
    %p218 = scmp.ne.s32.totalorder %s207, %s208
    %p219 = scmp.eq.s32.totalorder %s21, 0
    %p220 = por %p218, %p219
    %p221 = scmp.ne.s32.totalorder %s207, %s208
    %p222 = scmp.eq.s32.totalorder %s22, 1
    %p223 = por %p221, %p222
    %p225 = scmp.ne.s32.totalorder %s208, %s224
    %p226 = scmp.eq.s32.totalorder %s22, 0
    %p227 = por %p225, %p226
    %s228 = ssub.s32 %s16, %s23
    %p229 = scmp.eq.s32.totalorder %s228, 0
    %s231 = sadd.s32 %s230, 1
    %s232 = scalar_select %p229, %s230, %s231
    %p235 = pneg %p229
    %p236 = scmp.eq.s32.totalorder %s16, 1
    %p237 = por %p235, %p236
    %p238 = scmp.ne.s32.totalorder %s230, %s233
    %p239 = scmp.eq.s32.totalorder %s16, 0
    %p240 = por %p238, %p239
    %p241 = scmp.ne.s32.totalorder %s230, %s233
    %p242 = scmp.eq.s32.totalorder %s21, 1
    %p243 = por %p241, %p242
    %p244 = scmp.ne.s32.totalorder %s233, %s234
    %p245 = scmp.eq.s32.totalorder %s21, 0
    %p246 = por %p244, %p245
    %p247 = scmp.ne.s32.totalorder %s233, %s234
    %p248 = scmp.eq.s32.totalorder %s22, 1
    %p249 = por %p247, %p248
    %p251 = scmp.ne.s32.totalorder %s234, %s250
    %p252 = scmp.eq.s32.totalorder %s22, 0
    %p253 = por %p251, %p252
    %p254 = scmp.le.s32.totalorder 1, %s16
    %p255 = scmp.lt.s32.totalorder %s16, 3
    %p256 = pnand %p254, %p255
    %p257 = pneg %p256
    // Predicated region
    $region9: #{time_attention.1} parent=5 // pred_check
      _
    $region10: #{time_attention.1} parent=5 // pred_check_branch
      %259 = sbr.rel (%p256) target = $region12
    $region11: #{time_attention.1} parent=5 // pred_region
      %s260 = ssub.s32 %s16, 1
      // Predicated region
      $region13: #{time_attention.1} parent=11 // pred_check
        %p261 = pneg %p89
      $region14: #{time_attention.1} parent=11 // pred_check_branch
        %263 = sbr.rel (%p261) target = $region16
      $region15: #{time_attention.1} parent=11 // pred_region
        _
      $region16: #{time_attention.1} parent=11 // pred_fallthru
        _
      // Predicated region
      $region17: #{time_attention.1} parent=11 // pred_check
        %p264 = pneg %p110
      $region18: #{time_attention.1} parent=11 // pred_check_branch
        %266 = sbr.rel (%p264) target = $region20
      $region19: #{time_attention.1} parent=11 // pred_region
        _
      $region20: #{time_attention.1} parent=11 // pred_fallthru
        _
      // Predicated region
      $region21: #{time_attention.1} parent=11 // pred_check
        %p267 = pneg %p131
      $region22: #{time_attention.1} parent=11 // pred_check_branch
        %269 = sbr.rel (%p267) target = $region24
      $region23: #{time_attention.1} parent=11 // pred_region
        _
      $region24: #{time_attention.1} parent=11 // pred_fallthru
        _
      // Predicated region
      $region25: #{time_attention.1} parent=11 // pred_check
        %p270 = pneg %p152
      $region26: #{time_attention.1} parent=11 // pred_check_branch
        %272 = sbr.rel (%p270) target = $region28
      $region27: #{time_attention.1} parent=11 // pred_region
        _
      $region28: #{time_attention.1} parent=11 // pred_fallthru
        _
      // Predicated region
      $region29: #{time_attention.1} parent=11 // pred_check
        %p273 = pneg %p173
      $region30: #{time_attention.1} parent=11 // pred_check_branch
        %275 = sbr.rel (%p273) target = $region32
      $region31: #{time_attention.1} parent=11 // pred_region
        _
      $region32: #{time_attention.1} parent=11 // pred_fallthru
        _
      // Predicated region
      $region33: #{time_attention.1} parent=11 // pred_check
        %p276 = pneg %p194
      $region34: #{time_attention.1} parent=11 // pred_check_branch
        %278 = sbr.rel (%p276) target = $region36
      $region35: #{time_attention.1} parent=11 // pred_region
        _
      $region36: #{time_attention.1} parent=11 // pred_fallthru
        _
    $region12: #{time_attention.1} parent=5 // pred_fallthru
      _
    %p279 = scmp.lt.s32.totalorder %s16, 2
    // Predicated region
    $region37: #{time_attention.1} parent=5 // pred_check
      %p280 = pneg %p279
    $region38: #{time_attention.1} parent=5 // pred_check_branch
      %282 = sbr.rel (%p280) target = $region40
    $region39: #{time_attention.1} parent=5 // pred_region
      // Predicated region
      $region41: #{time_attention.1} parent=39 // pred_check
        %p283 = pneg %p36
      $region42: #{time_attention.1} parent=39 // pred_check_branch
        %285 = sbr.rel (%p283) target = $region44
      $region43: #{time_attention.1} parent=39 // pred_region
        %p286 = scmp.lt.s32.totalorder %s16, 1
        %s287 = scalar_select %p286, %s16, 1
        %s288 = smul.addr %s287, 8
        %s289 = scalar_lea.vmem %s0, %s288
      $region44: #{time_attention.1} parent=39 // pred_fallthru
        _
      // Predicated region
      $region45: #{time_attention.1} parent=39 // pred_check
        %p290 = pneg %p62
      $region46: #{time_attention.1} parent=39 // pred_check_branch
        %292 = sbr.rel (%p290) target = $region48
      $region47: #{time_attention.1} parent=39 // pred_region
        %p293 = scmp.lt.s32.totalorder %s16, 1
        %s294 = scalar_select %p293, %s16, 1
        %s295 = smul.addr %s294, 8
        %s296 = scalar_lea.vmem %s1, %s295
      $region48: #{time_attention.1} parent=39 // pred_fallthru
        _
    $region40: #{time_attention.1} parent=5 // pred_fallthru
      _
    %p297 = scmp.le.s32.totalorder 1, %s16
    %p298 = scmp.lt.s32.totalorder %s16, 3
    %p299 = pnand %p297, %p298
    %p300 = pneg %p299
    // Predicated region
    $region49: #{time_attention.1} parent=5 // pred_check
      _
    $region50: #{time_attention.1} parent=5 // pred_check_branch
      %302 = sbr.rel (%p299) target = $region52
    $region51: #{time_attention.1} parent=5 // pred_region
      %s303 = ssub.s32 %s16, 1
      %p304 = scmp.lt.s32.totalorder %s21, 1
      %s305 = scalar_select %p304, %s21, 1
      %s306 = smul.addr %s305, 8
      %s307 = scalar_lea.vmem %s0, %s306
      %p308 = pneg %p42
      %p309 = pneg %p39
      %p310 = scmp.lt.s32.totalorder %s21, 1
      %s311 = scalar_select %p310, %s21, 1
      %s312 = smul.addr %s311, 8
      %s313 = scalar_lea.vmem %s1, %s312
      %p314 = pneg %p68
      %p315 = pneg %p65
      %p316 = pneg %p89
      %p317 = pneg %p86
      %p318 = pneg %p110
      %p319 = pneg %p107
      %p320 = pneg %p131
      %p321 = pneg %p128
      %p322 = pneg %p152
      %p323 = pneg %p149
      %p324 = pneg %p173
      %p325 = pneg %p170
      %p326 = pneg %p194
      %p327 = pneg %p191
      %p328 = pneg %p220
      %p329 = pneg %p217
      %p330 = scmp.lt.s32.totalorder %s21, 1
      %s331 = scalar_select %p330, %s21, 1
      %s332 = smul.addr %s331, 8
      %s333 = scalar_lea.vmem %s8, %s332
      %p334 = pneg %p246
      %p335 = pneg %p243
      %p336 = scmp.lt.s32.totalorder %s21, 1
      %s337 = scalar_select %p336, %s21, 1
      %s338 = smul.addr %s337, 8
      %s339 = scalar_lea.vmem %s9, %s338
      %p340 = scmp.lt.s32.totalorder %s21, 1
      %s341 = scalar_select %p340, %s21, 1
      %s342 = smul.addr %s341, 8
      %s343 = scalar_lea.vmem %s0, %s342
      %p344 = scmp.lt.s32.totalorder %s21, 1
      %s345 = scalar_select %p344, %s21, 1
      %s346 = smul.addr %s345, 8
      %s347 = scalar_lea.vmem %s1, %s346
      %p348 = scmp.lt.s32.totalorder %s21, 1
      %s349 = scalar_select %p348, %s21, 1
      %s350 = smul.addr %s349, 8
      %s351 = scalar_lea.vmem %s8, %s350
      %p352 = scmp.lt.s32.totalorder %s21, 1
      %s353 = scalar_select %p352, %s21, 1
      %s354 = smul.addr %s353, 8
      %s355 = scalar_lea.vmem %s9, %s354
      %v356 = vld [vmem:[%s343] sm:$0xff]
      %v357 = vld [vmem:[%s347] sm:$0xff]
      %358 = vadd.xlane.f32.xlu0 %v356
      %v359 = vpop.xlane.xlu0 %358
      %360 = vadd.xlane.f32.xlu0 %v357
      %v361 = vpop.xlane.xlu0 %360
      %v362 = vld [vmem:[%s2] sm:$0xff]
      %v363 = vld [vmem:[%s3] sm:$0xff]
      %v365 = vlaneseq
      %v366 = vand.u32 %v365, 127
      %v367 = vlaneseq
      %v368 = vshrl.u32 %v367, 7
      %v369 = vsub.s32 %v366, %v368
      %v370 = vrot.slane %v361, %v369
      %vm371 = vcmask 64512
      %v372 = vsel %vm371, %v370, 0
      %374 = vmatprep.subr.mxu0 0.0
      %375 = vmatpush1.msra.mxu0 0.0
      %376 = vmatprep.subr.mxu0 0.0
      %377 = vmatpush1.msra.mxu0 0.0
      %378 = vmatprep.subr.mxu0 0.0
      %379 = vmatpush1.msra.mxu0 0.0
      %380 = vmatprep.subr.mxu0 0.0
      %381 = vmatpush1.msra.mxu0 0.0
      %382 = vmatprep.subr.mxu0 0.0
      %383 = vmatpush1.msra.mxu0 0.0
      %384 = vmatprep.subr.mxu0 0.0
      %385 = vmatpush1.msra.mxu0 0.0
      %386 = vmatprep.subr.mxu0 0.0
      %387 = vmatpush1.msra.mxu0 0.0
      %388 = vmatprep.subr.mxu0 0.0
      %389 = vmatpush1.msra.mxu0 0.0
      %390 = vmatprep.subr.mxu0 0.0
      %391 = vmatpush1.msra.mxu0 0.0
      %392 = vmatprep.subr.mxu0 0.0
      %393 = vmatpush1.msra.mxu0 0.0
      %394 = vmatprep.subr.mxu0 0.0
      %395 = vmatpush1.msra.mxu0 0.0
      %396 = vmatprep.subr.mxu0 0.0
      %397 = vmatpush1.msra.mxu0 0.0
      %398 = vmatprep.subr.mxu0 0.0
      %399 = vmatpush1.msra.mxu0 0.0
      %400 = vmatprep.subr.mxu0 0.0
      %401 = vmatpush1.msra.mxu0 0.0
      %402 = vmatprep.subr.mxu0 0.0
      %403 = vmatpush1.msra.mxu0 0.0
      %404 = vmatprep.subr.mxu0 0.0
      %405 = vmatpush1.msra.mxu0 %v363
      %406 = vmatprep.subr.mxu0 0.0
      %407 = vmatpush2.msra.mxu0 0.0
      %408 = vmatprep.subr.mxu0 0.0
      %409 = vmatpush2.msra.mxu0 0.0
      %410 = vmatprep.subr.mxu0 0.0
      %411 = vmatpush2.msra.mxu0 0.0
      %412 = vmatprep.subr.mxu0 0.0
      %413 = vmatpush2.msra.mxu0 0.0
      %414 = vmatprep.subr.mxu0 0.0
      %415 = vmatpush2.msra.mxu0 0.0
      %416 = vmatprep.subr.mxu0 0.0
      %417 = vmatpush2.msra.mxu0 0.0
      %418 = vmatprep.subr.mxu0 0.0
      %419 = vmatpush2.msra.mxu0 0.0
      %420 = vmatprep.subr.mxu0 0.0
      %421 = vmatpush2.msra.mxu0 0.0
      %422 = vmatprep.subr.mxu0 0.0
      %423 = vmatpush2.msra.mxu0 0.0
      %424 = vmatprep.subr.mxu0 0.0
      %425 = vmatpush2.msra.mxu0 0.0
      %426 = vmatprep.subr.mxu0 0.0
      %427 = vmatpush2.msra.mxu0 0.0
      %428 = vmatprep.subr.mxu0 0.0
      %429 = vmatpush2.msra.mxu0 0.0
      %430 = vmatprep.subr.mxu0 0.0
      %431 = vmatpush2.msra.mxu0 0.0
      %432 = vmatprep.subr.mxu0 0.0
      %433 = vmatpush2.msra.mxu0 0.0
      %434 = vmatprep.subr.mxu0 0.0
      %435 = vmatpush2.msra.mxu0 0.0
      %436 = vmatprep.subr.mxu0 0.0
      %437 = vmatpush2.msra.mxu0 0.0
      %438 = vmatprep.mubr.f32.mxu0 0.0
      %439 = vmatmul.mubr.f32.gmra.mxu0 %v372
      %v440 = vpop.f32.mrf.mxu0
      %v441 = vadd.f32 0.0, %v440
      %v442 = vpop.f32.mrf.mxu0
      %443 = vdwg.mxu0
      %v445 = vlaneseq
      %v446 = vshrl.u32 %v445, 7
      %v447 = vsub.s32 %v366, %v446
      %v448 = vrot.slane %v359, %v447
      %v449 = vsel %vm371, %v448, 0
      %451 = vmatprep.subr.mxu0 0.0
      %452 = vmatpush1.msra.mxu0 0.0
      %453 = vmatprep.subr.mxu0 0.0
      %454 = vmatpush1.msra.mxu0 0.0
      %455 = vmatprep.subr.mxu0 0.0
      %456 = vmatpush1.msra.mxu0 0.0
      %457 = vmatprep.subr.mxu0 0.0
      %458 = vmatpush1.msra.mxu0 0.0
      %459 = vmatprep.subr.mxu0 0.0
      %460 = vmatpush1.msra.mxu0 0.0
      %461 = vmatprep.subr.mxu0 0.0
      %462 = vmatpush1.msra.mxu0 0.0
      %463 = vmatprep.subr.mxu0 0.0
      %464 = vmatpush1.msra.mxu0 0.0
      %465 = vmatprep.subr.mxu0 0.0
      %466 = vmatpush1.msra.mxu0 0.0
      %467 = vmatprep.subr.mxu0 0.0
      %468 = vmatpush1.msra.mxu0 0.0
      %469 = vmatprep.subr.mxu0 0.0
      %470 = vmatpush1.msra.mxu0 0.0
      %471 = vmatprep.subr.mxu0 0.0
      %472 = vmatpush1.msra.mxu0 0.0
      %473 = vmatprep.subr.mxu0 0.0
      %474 = vmatpush1.msra.mxu0 0.0
      %475 = vmatprep.subr.mxu0 0.0
      %476 = vmatpush1.msra.mxu0 0.0
      %477 = vmatprep.subr.mxu0 0.0
      %478 = vmatpush1.msra.mxu0 0.0
      %479 = vmatprep.subr.mxu0 0.0
      %480 = vmatpush1.msra.mxu0 0.0
      %481 = vmatprep.subr.mxu0 0.0
      %482 = vmatpush1.msra.mxu0 %v362
      %483 = vmatprep.subr.mxu0 0.0
      %484 = vmatpush2.msra.mxu0 0.0
      %485 = vmatprep.subr.mxu0 0.0
      %486 = vmatpush2.msra.mxu0 0.0
      %487 = vmatprep.subr.mxu0 0.0
      %488 = vmatpush2.msra.mxu0 0.0
      %489 = vmatprep.subr.mxu0 0.0
      %490 = vmatpush2.msra.mxu0 0.0
      %491 = vmatprep.subr.mxu0 0.0
      %492 = vmatpush2.msra.mxu0 0.0
      %493 = vmatprep.subr.mxu0 0.0
      %494 = vmatpush2.msra.mxu0 0.0
      %495 = vmatprep.subr.mxu0 0.0
      %496 = vmatpush2.msra.mxu0 0.0
      %497 = vmatprep.subr.mxu0 0.0
      %498 = vmatpush2.msra.mxu0 0.0
      %499 = vmatprep.subr.mxu0 0.0
      %500 = vmatpush2.msra.mxu0 0.0
      %501 = vmatprep.subr.mxu0 0.0
      %502 = vmatpush2.msra.mxu0 0.0
      %503 = vmatprep.subr.mxu0 0.0
      %504 = vmatpush2.msra.mxu0 0.0
      %505 = vmatprep.subr.mxu0 0.0
      %506 = vmatpush2.msra.mxu0 0.0
      %507 = vmatprep.subr.mxu0 0.0
      %508 = vmatpush2.msra.mxu0 0.0
      %509 = vmatprep.subr.mxu0 0.0
      %510 = vmatpush2.msra.mxu0 0.0
      %511 = vmatprep.subr.mxu0 0.0
      %512 = vmatpush2.msra.mxu0 0.0
      %513 = vmatprep.subr.mxu0 0.0
      %514 = vmatpush2.msra.mxu0 0.0
      %515 = vmatprep.mubr.f32.mxu0 0.0
      %516 = vmatmul.mubr.f32.gmra.mxu0 %v449
      %v517 = vpop.f32.mrf.mxu0
      %v518 = vadd.f32 %v441, %v517
      %v519 = vpop.f32.mrf.mxu0
      %520 = vdwg.mxu0
      %v521 = vld [vmem:[%s6] sm:$0x1]
      %v522 = vmul.f32 %v518, %v521
      %v523 = vld [vmem:[%s7] sm:$0x1]
      %v524 = vadd.f32 %v522, %v523
      %v525 = vmax.f32 %v524, 0.0
      %v526 = vld [vmem:[%s4] sm:$0xff]
      %v528 = vsel %vm371, %v525, 0
      %530 = vmatprep.subr.mxu0 0.0
      %531 = vmatpush1.msra.mxu0 0.0
      %532 = vmatprep.subr.mxu0 0.0
      %533 = vmatpush1.msra.mxu0 0.0
      %534 = vmatprep.subr.mxu0 0.0
      %535 = vmatpush1.msra.mxu0 0.0
      %536 = vmatprep.subr.mxu0 0.0
      %537 = vmatpush1.msra.mxu0 0.0
      %538 = vmatprep.subr.mxu0 0.0
      %539 = vmatpush1.msra.mxu0 0.0
      %540 = vmatprep.subr.mxu0 0.0
      %541 = vmatpush1.msra.mxu0 0.0
      %542 = vmatprep.subr.mxu0 0.0
      %543 = vmatpush1.msra.mxu0 0.0
      %544 = vmatprep.subr.mxu0 0.0
      %545 = vmatpush1.msra.mxu0 0.0
      %546 = vmatprep.subr.mxu0 0.0
      %547 = vmatpush1.msra.mxu0 0.0
      %548 = vmatprep.subr.mxu0 0.0
      %549 = vmatpush1.msra.mxu0 0.0
      %550 = vmatprep.subr.mxu0 0.0
      %551 = vmatpush1.msra.mxu0 0.0
      %552 = vmatprep.subr.mxu0 0.0
      %553 = vmatpush1.msra.mxu0 0.0
      %554 = vmatprep.subr.mxu0 0.0
      %555 = vmatpush1.msra.mxu0 0.0
      %556 = vmatprep.subr.mxu0 0.0
      %557 = vmatpush1.msra.mxu0 0.0
      %558 = vmatprep.subr.mxu0 0.0
      %559 = vmatpush1.msra.mxu0 0.0
      %560 = vmatprep.subr.mxu0 0.0
      %561 = vmatpush1.msra.mxu0 %v526
      %562 = vmatprep.subr.mxu0 0.0
      %563 = vmatpush2.msra.mxu0 0.0
      %564 = vmatprep.subr.mxu0 0.0
      %565 = vmatpush2.msra.mxu0 0.0
      %566 = vmatprep.subr.mxu0 0.0
      %567 = vmatpush2.msra.mxu0 0.0
      %568 = vmatprep.subr.mxu0 0.0
      %569 = vmatpush2.msra.mxu0 0.0
      %570 = vmatprep.subr.mxu0 0.0
      %571 = vmatpush2.msra.mxu0 0.0
      %572 = vmatprep.subr.mxu0 0.0
      %573 = vmatpush2.msra.mxu0 0.0
      %574 = vmatprep.subr.mxu0 0.0
      %575 = vmatpush2.msra.mxu0 0.0
      %576 = vmatprep.subr.mxu0 0.0
      %577 = vmatpush2.msra.mxu0 0.0
      %578 = vmatprep.subr.mxu0 0.0
      %579 = vmatpush2.msra.mxu0 0.0
      %580 = vmatprep.subr.mxu0 0.0
      %581 = vmatpush2.msra.mxu0 0.0
      %582 = vmatprep.subr.mxu0 0.0
      %583 = vmatpush2.msra.mxu0 0.0
      %584 = vmatprep.subr.mxu0 0.0
      %585 = vmatpush2.msra.mxu0 0.0
      %586 = vmatprep.subr.mxu0 0.0
      %587 = vmatpush2.msra.mxu0 0.0
      %588 = vmatprep.subr.mxu0 0.0
      %589 = vmatpush2.msra.mxu0 0.0
      %590 = vmatprep.subr.mxu0 0.0
      %591 = vmatpush2.msra.mxu0 0.0
      %592 = vmatprep.subr.mxu0 0.0
      %593 = vmatpush2.msra.mxu0 0.0
      %594 = vmatprep.mubr.f32.mxu0 0.0
      %595 = vmatmul.mubr.f32.gmra.mxu0 %v528
      %v596 = vpop.f32.mrf.mxu0
      %v597 = vadd.f32 0.0, %v596
      %v598 = vpop.f32.mrf.mxu0
      %599 = vdwg.mxu0
      %v600 = vxor.u32 %v597, 2147483648
      %v601 = vmul.f32 %v600, 1.442695
      %v602 = vpow.pop %v601
      %v603 = vadd.f32 %v602, 1.0
      %v604 = vrcp.pop %v603
      %v605 = vmul.f32 1.0, %v604
      %v606 = vadd.f32 %v605, 1.0
      %v607 = vld [vmem:[%s5] sm:$0xff]
      %608 = vmatprep.subr.mxu0 0.0
      %609 = vmatpush1.msra.mxu0 0.0
      %610 = vmatprep.subr.mxu0 0.0
      %611 = vmatpush1.msra.mxu0 0.0
      %612 = vmatprep.subr.mxu0 0.0
      %613 = vmatpush1.msra.mxu0 0.0
      %614 = vmatprep.subr.mxu0 0.0
      %615 = vmatpush1.msra.mxu0 0.0
      %616 = vmatprep.subr.mxu0 0.0
      %617 = vmatpush1.msra.mxu0 0.0
      %618 = vmatprep.subr.mxu0 0.0
      %619 = vmatpush1.msra.mxu0 0.0
      %620 = vmatprep.subr.mxu0 0.0
      %621 = vmatpush1.msra.mxu0 0.0
      %622 = vmatprep.subr.mxu0 0.0
      %623 = vmatpush1.msra.mxu0 0.0
      %624 = vmatprep.subr.mxu0 0.0
      %625 = vmatpush1.msra.mxu0 0.0
      %626 = vmatprep.subr.mxu0 0.0
      %627 = vmatpush1.msra.mxu0 0.0
      %628 = vmatprep.subr.mxu0 0.0
      %629 = vmatpush1.msra.mxu0 0.0
      %630 = vmatprep.subr.mxu0 0.0
      %631 = vmatpush1.msra.mxu0 0.0
      %632 = vmatprep.subr.mxu0 0.0
      %633 = vmatpush1.msra.mxu0 0.0
      %634 = vmatprep.subr.mxu0 0.0
      %635 = vmatpush1.msra.mxu0 0.0
      %636 = vmatprep.subr.mxu0 0.0
      %637 = vmatpush1.msra.mxu0 0.0
      %638 = vmatprep.subr.mxu0 0.0
      %639 = vmatpush1.msra.mxu0 %v607
      %640 = vmatprep.subr.mxu0 0.0
      %641 = vmatpush2.msra.mxu0 0.0
      %642 = vmatprep.subr.mxu0 0.0
      %643 = vmatpush2.msra.mxu0 0.0
      %644 = vmatprep.subr.mxu0 0.0
      %645 = vmatpush2.msra.mxu0 0.0
      %646 = vmatprep.subr.mxu0 0.0
      %647 = vmatpush2.msra.mxu0 0.0
      %648 = vmatprep.subr.mxu0 0.0
      %649 = vmatpush2.msra.mxu0 0.0
      %650 = vmatprep.subr.mxu0 0.0
      %651 = vmatpush2.msra.mxu0 0.0
      %652 = vmatprep.subr.mxu0 0.0
      %653 = vmatpush2.msra.mxu0 0.0
      %654 = vmatprep.subr.mxu0 0.0
      %655 = vmatpush2.msra.mxu0 0.0
      %656 = vmatprep.subr.mxu0 0.0
      %657 = vmatpush2.msra.mxu0 0.0
      %658 = vmatprep.subr.mxu0 0.0
      %659 = vmatpush2.msra.mxu0 0.0
      %660 = vmatprep.subr.mxu0 0.0
      %661 = vmatpush2.msra.mxu0 0.0
      %662 = vmatprep.subr.mxu0 0.0
      %663 = vmatpush2.msra.mxu0 0.0
      %664 = vmatprep.subr.mxu0 0.0
      %665 = vmatpush2.msra.mxu0 0.0
      %666 = vmatprep.subr.mxu0 0.0
      %667 = vmatpush2.msra.mxu0 0.0
      %668 = vmatprep.subr.mxu0 0.0
      %669 = vmatpush2.msra.mxu0 0.0
      %670 = vmatprep.subr.mxu0 0.0
      %671 = vmatpush2.msra.mxu0 0.0
      %672 = vmatprep.mubr.f32.mxu0 0.0
      %673 = vmatmul.mubr.f32.gmra.mxu0 %v528
      %v674 = vpop.f32.mrf.mxu0
      %v675 = vadd.f32 0.0, %v674
      %v676 = vpop.f32.mrf.mxu0
      %677 = vdwg.mxu0
      %v678 = vxor.u32 %v675, 2147483648
      %v679 = vmul.f32 %v678, 1.442695
      %v680 = vpow.pop %v679
      %v681 = vadd.f32 %v680, 1.0
      %v682 = vrcp.pop %v681
      %v683 = vmul.f32 1.0, %v682
      %v684 = vadd.f32 %v683, 1.0
      %v685 = vlaneseq
      %v686 = vshrl.u32 %v685, 7
      %v687 = vsub.s32 0, %v686
      %v688 = vrot.slane %v606, %v687
      %690 = vbcast.lane.b32.xlu0 %v688, 256
      %v691 = vpop.permute.xlu0 %690
      %v692 = vmul.f32 %v356, %v691
      %693 = vst [vmem:[%s351] sm:$0xff] %v692
      %v694 = vlaneseq
      %v695 = vshrl.u32 %v694, 7
      %v696 = vsub.s32 0, %v695
      %v697 = vrot.slane %v684, %v696
      %699 = vbcast.lane.b32.xlu0 %v697, 256
      %v700 = vpop.permute.xlu0 %699
      %v701 = vmul.f32 %v357, %v700
      %702 = vst [vmem:[%s355] sm:$0xff] %v701
      %p703 = scmp.lt.s32.totalorder %s21, 1
      %s704 = scalar_select %p703, %s21, 1
      %s705 = smul.addr %s704, 8
      %s706 = scalar_lea.vmem %s8, %s705
      %p707 = scmp.lt.s32.totalorder %s21, 1
      %s708 = scalar_select %p707, %s21, 1
      %s709 = smul.addr %s708, 8
      %s710 = scalar_lea.vmem %s9, %s709
      // Predicated region
      $region53: #{time_attention.1} parent=51 // pred_check
        %p711 = pneg %p217
      $region54: #{time_attention.1} parent=51 // pred_check_branch
        %713 = sbr.rel (%p711) target = $region56
      $region55: #{time_attention.1} parent=51 // pred_region
        _
      $region56: #{time_attention.1} parent=51 // pred_fallthru
        _
      // Predicated region
      $region57: #{time_attention.1} parent=51 // pred_check
        %p714 = pneg %p243
      $region58: #{time_attention.1} parent=51 // pred_check_branch
        %716 = sbr.rel (%p714) target = $region60
      $region59: #{time_attention.1} parent=51 // pred_region
        _
      $region60: #{time_attention.1} parent=51 // pred_fallthru
        _
    $region52: #{time_attention.1} parent=5 // pred_fallthru
      _
    %p717 = scmp.le.s32.totalorder 2, %s16
    // Predicated region
    $region61: #{time_attention.1} parent=5 // pred_check
      %p718 = pneg %p717
    $region62: #{time_attention.1} parent=5 // pred_check_branch
      %720 = sbr.rel (%p718) target = $region64
    $region63: #{time_attention.1} parent=5 // pred_region
      %s721 = ssub.s32 %s16, 2
      // Predicated region
      $region65: #{time_attention.1} parent=63 // pred_check
        %p722 = pneg %p223
      $region66: #{time_attention.1} parent=63 // pred_check_branch
        %724 = sbr.rel (%p722) target = $region68
      $region67: #{time_attention.1} parent=63 // pred_region
        %p725 = scmp.lt.s32.totalorder %s22, 1
        %s726 = scalar_select %p725, %s22, 1
        %s727 = smul.addr %s726, 8
        %s728 = scalar_lea.vmem %s8, %s727
      $region68: #{time_attention.1} parent=63 // pred_fallthru
        _
      // Predicated region
      $region69: #{time_attention.1} parent=63 // pred_check
        %p729 = pneg %p249
      $region70: #{time_attention.1} parent=63 // pred_check_branch
        %731 = sbr.rel (%p729) target = $region72
      $region71: #{time_attention.1} parent=63 // pred_region
        %p732 = scmp.lt.s32.totalorder %s22, 1
        %s733 = scalar_select %p732, %s22, 1
        %s734 = smul.addr %s733, 8
        %s735 = scalar_lea.vmem %s9, %s734
      $region72: #{time_attention.1} parent=63 // pred_fallthru
        _
    $region64: #{time_attention.1} parent=5 // pred_fallthru
      _
  $region6: #{time_attention.1} parent=0 // loop_footer
    %s20 = sadd.s32 1, %s16
  $region7: #{time_attention.1} parent=0 // loop_footer_branch
    %15 = sbr.rel target = $region3
  $region8: #{time_attention.1} parent=0 // loop_exit
    _

</llo_original>
